<compile_context>
chip_gen: v6e
topology: v6e:2x2x1
jax: 0.10.0
libtpu: 0.0.40
codegen_flags: <defaults>
</compile_context>

<pallas_src>
import functools

import jax
import jax.numpy as jnp
from jax import lax
from jax.experimental import pallas as pl
from jax.experimental.pallas import tpu as pltpu


# ------------------------------ tiling helpers ------------------------------ #

def _round_up(x, m):
    return ((x + m - 1) // m) * m


def _choose_tm(m):
    """Row tile: as large as 512 without gross padding waste on tiny inputs."""
    for tm in (512, 256, 128):
        if m >= tm:
            return tm
    return _round_up(max(m, 8), 8)


def _choose_k_tiling(k):
    """Returns (padded K, K tile).  K tile divides padded K."""
    kp = _round_up(k, 128)
    if kp <= 512:
        return kp, kp          # single K block
    tk = 512
    return _round_up(k, tk), tk


# ----------------------------- Pallas kernels ------------------------------ #

def _matmul_stats_kernel(a_ref, b_ref, o_ref, s_ref, q_ref, acc_ref):
    """Conv matmul (bf16 in, f32 acc) fused with per-channel sum / sum-sq."""
    i = pl.program_id(0)
    k = pl.program_id(1)

    @pl.when(jnp.logical_and(i == 0, k == 0))
    def _():
        s_ref[...] = jnp.zeros_like(s_ref)
        q_ref[...] = jnp.zeros_like(q_ref)

    @pl.when(k == 0)
    def _():
        acc_ref[...] = jnp.zeros_like(acc_ref)

    acc_ref[...] += jnp.dot(a_ref[...], b_ref[...],
                            preferred_element_type=jnp.float32)

    @pl.when(k == pl.num_programs(1) - 1)
    def _():
        conv = acc_ref[...]
        o_ref[...] = conv.astype(o_ref.dtype)
        s_ref[...] += jnp.sum(conv, axis=0, keepdims=True)
        q_ref[...] += jnp.sum(conv * conv, axis=0, keepdims=True)


def matmul_stats(a, b, tm, tk):
    """(Mp,Kp)bf16 @ (Kp,Cp)bf16 -> (conv bf16 (Mp,Cp), sum f32 (1,Cp), sumsq f32 (1,Cp))."""
    mp, kp = a.shape
    _, cp = b.shape
    return pl.pallas_call(
        _matmul_stats_kernel,
        out_shape=(jax.ShapeDtypeStruct((mp, cp), jnp.bfloat16),
                   jax.ShapeDtypeStruct((1, cp), jnp.float32),
                   jax.ShapeDtypeStruct((1, cp), jnp.float32)),
        grid_spec=pltpu.PrefetchScalarGridSpec(
            num_scalar_prefetch=0,
            grid=(mp // tm, kp // tk),
            in_specs=[pl.BlockSpec((tm, tk), lambda i, k: (i, k)),
                      pl.BlockSpec((tk, cp), lambda i, k: (k, 0))],
            out_specs=(pl.BlockSpec((tm, cp), lambda i, k: (i, 0)),
                       pl.BlockSpec((1, cp), lambda i, k: (0, 0)),
                       pl.BlockSpec((1, cp), lambda i, k: (0, 0))),
            scratch_shapes=[pltpu.VMEM((tm, cp), jnp.float32)],
        ),
        # Stats outputs are accumulated across the row axis as well, so both
        # grid axes carry a reduction -> "arbitrary".
        compiler_params=pltpu.CompilerParams(
            dimension_semantics=("arbitrary", "arbitrary")),
    )(a, b)


def _affine_kernel(x_ref, sc_ref, bi_ref, o_ref, *, relu):
    y = x_ref[...].astype(jnp.float32) * sc_ref[...] + bi_ref[...]
    if relu:
        y = jnp.maximum(y, 0.0)
    o_ref[...] = y.astype(o_ref.dtype)


def _affine_res_kernel(x_ref, sc_ref, bi_ref, r_ref, o_ref, *, relu):
    y = (x_ref[...].astype(jnp.float32) * sc_ref[...] + bi_ref[...]
         + r_ref[...].astype(jnp.float32))
    if relu:
        y = jnp.maximum(y, 0.0)
    o_ref[...] = y.astype(o_ref.dtype)


def affine(x, scale, bias, tm, residual=None, relu=False, out_dtype=jnp.float32):
    """y = x*scale + bias (+ residual) (+ relu); x bf16 (M,C); scale,bias f32 (1,C)."""
    M, C = x.shape
    row_spec = pl.BlockSpec((tm, C), lambda i: (i, 0))
    vec_spec = pl.BlockSpec((1, C), lambda i: (0, 0))
    if residual is None:
        kernel = functools.partial(_affine_kernel, relu=relu)
        in_specs = [row_spec, vec_spec, vec_spec]
        args = (x, scale, bias)
    else:
        kernel = functools.partial(_affine_res_kernel, relu=relu)
        in_specs = [row_spec, vec_spec, vec_spec,
                    pl.BlockSpec((tm, C), lambda i: (i, 0))]
        args = (x, scale, bias, residual)
    return pl.pallas_call(
        kernel,
        out_shape=jax.ShapeDtypeStruct((M, C), out_dtype),
        grid_spec=pltpu.PrefetchScalarGridSpec(
            num_scalar_prefetch=0,
            grid=(M // tm,),
            in_specs=in_specs,
            out_specs=pl.BlockSpec((tm, C), lambda i: (i, 0)),
        ),
        compiler_params=pltpu.CompilerParams(
            dimension_semantics=("parallel",)),
    )(*args)


# ------------------------------ JAX glue ----------------------------------- #

def im2col(x_nhwc, ksize, stride, padding):
    N, H, W, C = x_nhwc.shape
    Ho = (H + 2 * padding - ksize) // stride + 1
    Wo = (W + 2 * padding - ksize) // stride + 1
    xp = jnp.pad(x_nhwc, ((0, 0), (padding, padding), (padding, padding), (0, 0)))
    cols = []
    for kh in range(ksize):
        for kw in range(ksize):
            cols.append(xp[:, kh:kh + stride * Ho:stride,
                           kw:kw + stride * Wo:stride, :])
    patches = jnp.stack(cols, axis=3)  # (N, Ho, Wo, K*K, C)
    return patches.reshape(N * Ho * Wo, ksize * ksize * C), (N, Ho, Wo)


def conv_bn(x_nhwc, w_torch, gamma, beta, *, ksize, stride, padding,
            residual_padded=None, relu=False, eps=1e-5,
            out_dtype=jnp.float32, keep_padded=False):
    """conv (no bias) + BatchNorm (training-mode batch stats) [+ residual] [+ relu].

    If keep_padded: returns the lane-padded (Mp, Cp) activation (no slice /
    reshape), for direct reuse as a residual in a later conv_bn.
    residual_padded, if given, must already be (Mp, Cp)."""
    Cout = w_torch.shape[0]

    # bf16 patches (halves the im2col HBM blowup; MXU accumulates in f32).
    patches, (N, Ho, Wo) = im2col(x_nhwc.astype(jnp.bfloat16), ksize, stride, padding)
    M, K = patches.shape

    tm = _choose_tm(M)
    Mp = _round_up(M, tm)
    Kp, tk = _choose_k_tiling(K)
    Cp = _round_up(Cout, 128)          # lane-dense output channels

    patches_p = jnp.pad(patches, ((0, Mp - M), (0, Kp - K)))

    # PyTorch weight (Cout, Cin, KH, KW) -> (KH, KW, Cin, Cout) -> (K, Cout), padded bf16
    w = jnp.transpose(w_torch, (2, 3, 1, 0)).reshape(K, Cout)
    w_p = jnp.pad(w, ((0, Kp - K), (0, Cp - Cout))).astype(jnp.bfloat16)

    # Fused conv matmul + per-channel stats (zero-padded rows/cols contribute 0).
    conv, s, q = matmul_stats(patches_p, w_p, tm, tk)

    mean = s / M
    var = jnp.maximum(q / M - mean * mean, 0.0)  # biased var; clamp cancellation
    gamma_p = jnp.pad(gamma, (0, Cp - Cout)).reshape(1, Cp)
    beta_p = jnp.pad(beta, (0, Cp - Cout)).reshape(1, Cp)
    scale = gamma_p * lax.rsqrt(var + eps)
    bias = beta_p - mean * scale

    if residual_padded is not None:
        assert residual_padded.shape == (Mp, Cp), (residual_padded.shape, (Mp, Cp))

    y = affine(conv, scale, bias, tm, residual=residual_padded, relu=relu,
               out_dtype=out_dtype)
    if keep_padded:
        return y
    return y[:M, :Cout].reshape(N, Ho, Wo, Cout)


def special_block_forward(x_nchw, p, stride):
    """Pallas implementation of SpecialBlock.forward. Input/output are NCHW."""
    x = jnp.transpose(x_nchw, (0, 2, 3, 1)).astype(jnp.float32)  # NHWC

    # identity = BN(Conv1x1_stride[0](x)) -- kept lane-padded bf16, reused directly
    # as the residual of the second conv's fused affine pass.
    identity_p = conv_bn(x, p['w_ch'], p['g_ch'], p['b_ch'],
                         ksize=1, stride=stride[0], padding=0, relu=False,
                         out_dtype=jnp.bfloat16, keep_padded=True)
    # x = relu(BN(Conv3x3_stride[0](x))) -- bf16 intermediate (feeds next im2col).
    y = conv_bn(x, p['w1'], p['g1'], p['b1'],
                ksize=3, stride=stride[0], padding=1, relu=True,
                out_dtype=jnp.bfloat16)
    # out = relu(BN(Conv3x3_stride[1](y)) + identity)
    out = conv_bn(y, p['w2'], p['g2'], p['b2'],
                  ksize=3, stride=stride[1], padding=1,
                  residual_padded=identity_p, relu=True,
                  out_dtype=jnp.float32)
    return jnp.transpose(out, (0, 3, 1, 2))  # back to NCHW


# --------------------------- pure-JAX reference ----------------------------- #

def _ref_conv(x, w, stride, padding):
    return lax.conv_general_dilated(x, w, (stride, stride),
                                    [(padding, padding)] * 2,
                                    dimension_numbers=('NCHW', 'OIHW', 'NCHW'))


def _ref_bn(x, gamma, beta, eps=1e-5):
    mean = jnp.mean(x, axis=(0, 2, 3), keepdims=True)
    var = jnp.mean((x - mean) ** 2, axis=(0, 2, 3), keepdims=True)
    return ((x - mean) * lax.rsqrt(var + eps) * gamma.reshape(1, -1, 1, 1)
            + beta.reshape(1, -1, 1, 1))


def ref_forward(x, p, stride):
    identity = _ref_bn(_ref_conv(x, p['w_ch'], stride[0], 0), p['g_ch'], p['b_ch'])
    y = jax.nn.relu(_ref_bn(_ref_conv(x, p['w1'], stride[0], 1), p['g1'], p['b1']))
    y = _ref_bn(_ref_conv(y, p['w2'], stride[1], 1), p['g2'], p['b2'])
    return jax.nn.relu(y + identity)


# --------------------------------- main ------------------------------------- #

if __name__ == "__main__":
    key = jax.random.PRNGKey(0)
    N, Cin, H, W = 2, 4, 16, 16
    Cout = 8
    stride = (2, 1)  # typical ResNet18 SpecialBlock stride; stride[1]=1 so residual add matches

    k0, k1, k2, k3 = jax.random.split(key, 4)
    x = jax.random.normal(k0, (N, Cin, H, W), jnp.float32)
    params = {
        'w_ch': 0.1 * jax.random.normal(k1, (Cout, Cin, 1, 1), jnp.float32),
        'g_ch': jnp.ones((Cout,), jnp.float32),
        'b_ch': jnp.zeros((Cout,), jnp.float32),
        'w1':   0.1 * jax.random.normal(k2, (Cout, Cin, 3, 3), jnp.float32),
        'g1':   jnp.ones((Cout,), jnp.float32),
        'b1':   jnp.zeros((Cout,), jnp.float32),
        'w2':   0.1 * jax.random.normal(k3, (Cout, Cout, 3, 3), jnp.float32),
        'g2':   jnp.ones((Cout,), jnp.float32),
        'b2':   jnp.zeros((Cout,), jnp.float32),
    }

    out = jax.block_until_ready(special_block_forward(x, params, stride))
    ref = jax.block_until_ready(ref_forward(x, params, stride))

    assert out.shape == ref.shape == (N, Cout, H // stride[0], W // stride[0])
    # bf16 conv / intermediate path -> looser tolerance than pure-f32.
    max_err = float(jnp.max(jnp.abs(out - ref)))
    rel_err = max_err / (float(jnp.max(jnp.abs(ref))) + 1e-6)
    assert max_err < 1e-1 and rel_err < 5e-2, f"max abs err {max_err}, rel {rel_err}"
    print("KERNEL_OK")
</pallas_src>

<mosaic_0001>
module attributes {stable_mosaic.version = 11 : i64} {
  func.func @_matmul_stats_kernel(%arg0: i32, %arg1: i32, %arg2: memref<128x128xbf16, #tpu.memory_space<vmem>>, %arg3: memref<128x128xbf16, #tpu.memory_space<vmem>>, %arg4: memref<128x128xbf16, #tpu.memory_space<vmem>>, %arg5: memref<1x128xf32, #tpu.memory_space<vmem>>, %arg6: memref<1x128xf32, #tpu.memory_space<vmem>>, %arg7: memref<128x128xf32, #tpu.memory_space<vmem>>) attributes {dimension_semantics = [#tpu.dimension_semantics<arbitrary>, #tpu.dimension_semantics<arbitrary>], iteration_bounds = array<i64: 1, 1>, scalar_prefetch = 0 : i64, scratch_operands = 1 : i64, tpu.core_type = #tpu.core_type<tc>, window_params = [{transform_indices = @transform_0, window_bounds = array<i64: 128, 128>}, {transform_indices = @transform_1, window_bounds = array<i64: 128, 128>}, {transform_indices = @transform_2, window_bounds = array<i64: 128, 128>}, {pipeline_mode = #tpu.pipeline_mode<synchronous>, transform_indices = @transform_3, window_bounds = array<i64: 1, 128>}, {pipeline_mode = #tpu.pipeline_mode<synchronous>, transform_indices = @transform_4, window_bounds = array<i64: 1, 128>}]} {
    %c0_i32 = arith.constant 0 : i32
    %0 = arith.cmpi eq, %arg0, %c0_i32 : i32
    %c0_i32_0 = arith.constant 0 : i32
    %1 = arith.cmpi eq, %arg1, %c0_i32_0 : i32
    %2 = arith.andi %0, %1 : i1
    %3 = arith.extui %2 : i1 to i32
    %c0_i32_1 = arith.constant 0 : i32
    %4 = arith.cmpi ne, %3, %c0_i32_1 : i32
    scf.if %4 {
      %cst_13 = arith.constant 0.000000e+00 : f32
      %17 = vector.broadcast %cst_13 : f32 to vector<1x128xf32>
      %c0_14 = arith.constant 0 : index
      %c0_15 = arith.constant 0 : index
      %18 = vector.load %arg5[%c0_14, %c0_15] : memref<1x128xf32, #tpu.memory_space<vmem>>, vector<1x128xf32>
      tpu.vector_store %arg5[%c0_14, %c0_15], %17 {strides = array<i32>} : memref<1x128xf32, #tpu.memory_space<vmem>>, vector<1x128xf32>,
      %cst_16 = arith.constant 0.000000e+00 : f32
      %19 = vector.broadcast %cst_16 : f32 to vector<1x128xf32>
      %c0_17 = arith.constant 0 : index
      %c0_18 = arith.constant 0 : index
      %20 = vector.load %arg6[%c0_17, %c0_18] : memref<1x128xf32, #tpu.memory_space<vmem>>, vector<1x128xf32>
      tpu.vector_store %arg6[%c0_17, %c0_18], %19 {strides = array<i32>} : memref<1x128xf32, #tpu.memory_space<vmem>>, vector<1x128xf32>,
    } else {
    }
    %c0_i32_2 = arith.constant 0 : i32
    %5 = arith.cmpi eq, %arg1, %c0_i32_2 : i32
    %6 = arith.extui %5 : i1 to i32
    %c0_i32_3 = arith.constant 0 : i32
    %7 = arith.cmpi ne, %6, %c0_i32_3 : i32
    scf.if %7 {
      %cst_13 = arith.constant 0.000000e+00 : f32
      %17 = vector.broadcast %cst_13 : f32 to vector<128x128xf32>
      %c0_14 = arith.constant 0 : index
      %c0_15 = arith.constant 0 : index
      %18 = vector.load %arg7[%c0_14, %c0_15] : memref<128x128xf32, #tpu.memory_space<vmem>>, vector<128x128xf32>
      tpu.vector_store %arg7[%c0_14, %c0_15], %17 {strides = array<i32>} : memref<128x128xf32, #tpu.memory_space<vmem>>, vector<128x128xf32>,
    } else {
    }
    %c0 = arith.constant 0 : index
    %c0_4 = arith.constant 0 : index
    %8 = vector.load %arg7[%c0, %c0_4] : memref<128x128xf32, #tpu.memory_space<vmem>>, vector<128x128xf32>
    %c0_5 = arith.constant 0 : index
    %c0_6 = arith.constant 0 : index
    %9 = vector.load %arg2[%c0_5, %c0_6] : memref<128x128xbf16, #tpu.memory_space<vmem>>, vector<128x128xbf16>
    %c0_7 = arith.constant 0 : index
    %c0_8 = arith.constant 0 : index
    %10 = vector.load %arg3[%c0_7, %c0_8] : memref<128x128xbf16, #tpu.memory_space<vmem>>, vector<128x128xbf16>
    %cst = arith.constant dense<0.000000e+00> : vector<128x128xf32>
    %11 = tpu.matmul %9, %10, %cst {dimension_numbers = #tpu.dot_dimension_numbers<[1], [0], [0], [1], [0, 0, 1, 1], [], []>} : vector<128x128xbf16>, vector<128x128xbf16>, vector<128x128xf32> -> vector<128x128xf32>
    %12 = arith.addf %8, %11 : vector<128x128xf32>
    %c0_9 = arith.constant 0 : index
    %c0_10 = arith.constant 0 : index
    %13 = vector.load %arg7[%c0_9, %c0_10] : memref<128x128xf32, #tpu.memory_space<vmem>>, vector<128x128xf32>
    tpu.vector_store %arg7[%c0_9, %c0_10], %12 {strides = array<i32>} : memref<128x128xf32, #tpu.memory_space<vmem>>, vector<128x128xf32>,
    %c0_i32_11 = arith.constant 0 : i32
    %14 = arith.cmpi eq, %arg1, %c0_i32_11 : i32
    %15 = arith.extui %14 : i1 to i32
    %c0_i32_12 = arith.constant 0 : i32
    %16 = arith.cmpi ne, %15, %c0_i32_12 : i32
    scf.if %16 {
      %c0_13 = arith.constant 0 : index
      %c0_14 = arith.constant 0 : index
      %17 = vector.load %arg7[%c0_13, %c0_14] : memref<128x128xf32, #tpu.memory_space<vmem>>, vector<128x128xf32>
      %18 = arith.truncf %17 : vector<128x128xf32> to vector<128x128xbf16>
      %c0_15 = arith.constant 0 : index
      %c0_16 = arith.constant 0 : index
      %19 = vector.load %arg4[%c0_15, %c0_16] : memref<128x128xbf16, #tpu.memory_space<vmem>>, vector<128x128xbf16>
      tpu.vector_store %arg4[%c0_15, %c0_16], %18 {strides = array<i32>} : memref<128x128xbf16, #tpu.memory_space<vmem>>, vector<128x128xbf16>,
      %c0_17 = arith.constant 0 : index
      %c0_18 = arith.constant 0 : index
      %20 = vector.load %arg5[%c0_17, %c0_18] : memref<1x128xf32, #tpu.memory_space<vmem>>, vector<1x128xf32>
      %cst_19 = arith.constant dense<0.000000e+00> : vector<128xf32>
      %21 = vector.multi_reduction <add>, %17, %cst_19 [0] : vector<128x128xf32> to vector<128xf32>
      %22 = vector.shape_cast %21 : vector<128xf32> to vector<1x128xf32>
      %23 = arith.addf %20, %22 : vector<1x128xf32>
      %c0_20 = arith.constant 0 : index
      %c0_21 = arith.constant 0 : index
      %24 = vector.load %arg5[%c0_20, %c0_21] : memref<1x128xf32, #tpu.memory_space<vmem>>, vector<1x128xf32>
      tpu.vector_store %arg5[%c0_20, %c0_21], %23 {strides = array<i32>} : memref<1x128xf32, #tpu.memory_space<vmem>>, vector<1x128xf32>,
      %c0_22 = arith.constant 0 : index
      %c0_23 = arith.constant 0 : index
      %25 = vector.load %arg6[%c0_22, %c0_23] : memref<1x128xf32, #tpu.memory_space<vmem>>, vector<1x128xf32>
      %26 = arith.mulf %17, %17 : vector<128x128xf32>
      %cst_24 = arith.constant dense<0.000000e+00> : vector<128xf32>
      %27 = vector.multi_reduction <add>, %26, %cst_24 [0] : vector<128x128xf32> to vector<128xf32>
      %28 = vector.shape_cast %27 : vector<128xf32> to vector<1x128xf32>
      %29 = arith.addf %25, %28 : vector<1x128xf32>
      %c0_25 = arith.constant 0 : index
      %c0_26 = arith.constant 0 : index
      %30 = vector.load %arg6[%c0_25, %c0_26] : memref<1x128xf32, #tpu.memory_space<vmem>>, vector<1x128xf32>
      tpu.vector_store %arg6[%c0_25, %c0_26], %29 {strides = array<i32>} : memref<1x128xf32, #tpu.memory_space<vmem>>, vector<1x128xf32>,
    } else {
    }
    return
  }
  func.func @transform_0(%arg0: i32, %arg1: i32) -> (i32, i32) {
    %c0_i32 = arith.constant 0 : i32
    return %arg0, %arg1 : i32, i32
  }
  func.func @transform_1(%arg0: i32, %arg1: i32) -> (i32, i32) {
    %c0_i32 = arith.constant 0 : i32
    %c0_i32_0 = arith.constant 0 : i32
    return %arg1, %c0_i32 : i32, i32
  }
  func.func @transform_2(%arg0: i32, %arg1: i32) -> (i32, i32) {
    %c0_i32 = arith.constant 0 : i32
    %c0_i32_0 = arith.constant 0 : i32
    return %arg0, %c0_i32 : i32, i32
  }
  func.func @transform_3(%arg0: i32, %arg1: i32) -> (i32, i32) {
    %c0_i32 = arith.constant 0 : i32
    %c0_i32_0 = arith.constant 0 : i32
    %c0_i32_1 = arith.constant 0 : i32
    return %c0_i32, %c0_i32_0 : i32, i32
  }
  func.func @transform_4(%arg0: i32, %arg1: i32) -> (i32, i32) {
    %c0_i32 = arith.constant 0 : i32
    %c0_i32_0 = arith.constant 0 : i32
    %c0_i32_1 = arith.constant 0 : i32
    return %c0_i32, %c0_i32_0 : i32, i32
  }
}

</mosaic_0001>

<llo_original>
// kernel: tpu_custom_call.1
$region0: #{tpu_custom_call.1}
  #allocation0 [shape = 'u32[]', space=smem, size = 0x4, offset = 0x4, fixed_abs, tag = 'smem constant byte address 0x4 - core index']
  #allocation1 [shape = 'u32[144,128]{1,0:T(1,128)}', space=vmem, size = 0x12000, scoped, tag = 'internal scratch']
  #allocation2 [shape = 'f32[128,128]{1,0:T(8,128)}', space=vmem, size = 0x10000, scoped, tag = 'scratch operand']
  %s0 = inlined_call_operand.hbm [shape: bf16[128,128], index: 0, kind: input, shape index: {}]
  %s1 = inlined_call_operand.hbm [shape: bf16[128,128], index: 1, kind: input, shape index: {}]
  %s2 = inlined_call_operand.hbm [shape: bf16[128,128], index: 2, kind: output, shape index: {0}]
  %s3 = inlined_call_operand.hbm [shape: f32[1,128], index: 3, kind: output, shape index: {1}]
  %s4 = inlined_call_operand.hbm [shape: f32[1,128], index: 4, kind: output, shape index: {2}]
  %5 = xla_tuple %s2, %s3, %s4
  %s6 = sld [smem:[#allocation0]]
  $region54: #{tpu_custom_call.1} parent=0
    _
  %s8 = ssub.s32 1, %s6
  %s9 = scalar_select 0, %s8, %s6
  $region1: #{tpu_custom_call.1} parent=0
    #allocation3 [shape = 'u8[32768]{0}', space=vmem, size = 0x8000, scoped, tag = 'input window, operand 0, single buffered']
    #allocation4 [shape = 's32[1]{0}', space=sflag, size = 0x4, scoped, tag = 'scoped memory for tpu_custom_call.1']
    #allocation5 [shape = 's32[1]{0}', space=sflag, size = 0x4, scoped, tag = 'scoped memory for tpu_custom_call.1']
    #allocation6 [shape = 'u8[32768]{0}', space=vmem, size = 0x8000, scoped, tag = 'input window, operand 1, single buffered']
    #allocation7 [shape = 's32[1]{0}', space=sflag, size = 0x4, scoped, tag = 'scoped memory for tpu_custom_call.1']
    #allocation8 [shape = 'u8[32768]{0}', space=vmem, size = 0x8000, scoped, tag = 'output window, operand 0, single buffered']
    #allocation9 [shape = 'u8[512]{0}', space=vmem, size = 0x400, scoped, tag = 'output window, operand 1, single buffered']
    #allocation10 [shape = 's32[1]{0}', space=sflag, size = 0x4, scoped, tag = 'scoped memory for tpu_custom_call.1']
    #allocation11 [shape = 'u8[512]{0}', space=vmem, size = 0x400, scoped, tag = 'output window, operand 2, single buffered']
    %10 = vsyncpa [#allocation4], 0
    %11 = vsyncpa [#allocation7], 0
    %12 = vsyncpa [#allocation5], 0
    %13 = vsyncpa [#allocation10], 0
    // Predicated region
    $region2: #{tpu_custom_call.1} parent=1 // pred_check
      _
    $region3: #{tpu_custom_call.1} parent=1 // pred_check_branch
      %15 = sbr.rel (0) target = $region5
    $region4: #{tpu_custom_call.1} parent=1 // pred_region
      %s17 = ssub.s32 1024, 1024
      %18 = vsyncadd [#allocation4], %s17
      %s19 = sshll.u32 [#allocation3], 4
      %s20 = int_to_ptr.vmem [resolvable:$true] %s19
      %25 = dma.hbm_to_vmem [thread:$0]  %s0, 1024, %s20, [#allocation4], 64, 64, 4
    $region5: #{tpu_custom_call.1} parent=1 // pred_fallthru
      _
    // Predicated region
    $region6: #{tpu_custom_call.1} parent=1 // pred_check
      _
    $region7: #{tpu_custom_call.1} parent=1 // pred_check_branch
      %27 = sbr.rel (0) target = $region9
    $region8: #{tpu_custom_call.1} parent=1 // pred_region
      %s29 = ssub.s32 1024, 1024
      %30 = vsyncadd [#allocation7], %s29
      %s31 = sshll.u32 [#allocation6], 4
      %s32 = int_to_ptr.vmem [resolvable:$true] %s31
      %37 = dma.hbm_to_vmem [thread:$0]  %s1, 1024, %s32, [#allocation7], 64, 64, 4
    $region9: #{tpu_custom_call.1} parent=1 // pred_fallthru
      _
    // Predicated region
    $region10: #{tpu_custom_call.1} parent=1 // pred_check
      _
    $region11: #{tpu_custom_call.1} parent=1 // pred_check_branch
      %39 = sbr.rel (0) target = $region13
    $region12: #{tpu_custom_call.1} parent=1 // pred_region
      %40 = dma.done [#allocation4], 1024
    $region13: #{tpu_custom_call.1} parent=1 // pred_fallthru
      _
    // Predicated region
    $region14: #{tpu_custom_call.1} parent=1 // pred_check
      _
    $region15: #{tpu_custom_call.1} parent=1 // pred_check_branch
      %42 = sbr.rel (0) target = $region17
    $region16: #{tpu_custom_call.1} parent=1 // pred_region
      %43 = dma.done [#allocation7], 1024
    $region17: #{tpu_custom_call.1} parent=1 // pred_fallthru
      _
    %p45 = scmp.eq.s32.totalorder 0, 0
    %p46 = scmp.eq.s32.totalorder 0, 0
    %p47 = pnand %p45, %p46
    %p48 = pneg %p47
    // Predicated region
    $region18: #{tpu_custom_call.1} parent=1 // pred_check
      _
    $region19: #{tpu_custom_call.1} parent=1 // pred_check_branch
      %50 = sbr.rel (%p47) target = $region21
    $region20: #{tpu_custom_call.1} parent=1 // pred_region
      %51 = vst [vmem:[#allocation9] sm:$0x1] 0.0
      %52 = vst [vmem:[#allocation11] sm:$0x1] 0.0
    $region21: #{tpu_custom_call.1} parent=1 // pred_fallthru
      _
    // Predicated region
    $region22: #{tpu_custom_call.1} parent=1 // pred_check
      %p53 = pneg %p46
    $region23: #{tpu_custom_call.1} parent=1 // pred_check_branch
      %55 = sbr.rel (%p53) target = $region25
    $region24: #{tpu_custom_call.1} parent=1 // pred_region
      %56 = vst [vmem:[#allocation2] sm:$0xff] 0.0
      %57 = vst [vmem:[#allocation2 + $0x8] sm:$0xff] 0.0
      %58 = vst [vmem:[#allocation2 + $0x10] sm:$0xff] 0.0
      %59 = vst [vmem:[#allocation2 + $0x18] sm:$0xff] 0.0
      %60 = vst [vmem:[#allocation2 + $0x20] sm:$0xff] 0.0
      %61 = vst [vmem:[#allocation2 + $0x28] sm:$0xff] 0.0
      %62 = vst [vmem:[#allocation2 + $0x30] sm:$0xff] 0.0
      %63 = vst [vmem:[#allocation2 + $0x38] sm:$0xff] 0.0
      %64 = vst [vmem:[#allocation2 + $0x40] sm:$0xff] 0.0
      %65 = vst [vmem:[#allocation2 + $0x48] sm:$0xff] 0.0
      %66 = vst [vmem:[#allocation2 + $0x50] sm:$0xff] 0.0
      %67 = vst [vmem:[#allocation2 + $0x58] sm:$0xff] 0.0
      %68 = vst [vmem:[#allocation2 + $0x60] sm:$0xff] 0.0
      %69 = vst [vmem:[#allocation2 + $0x68] sm:$0xff] 0.0
      %70 = vst [vmem:[#allocation2 + $0x70] sm:$0xff] 0.0
      %71 = vst [vmem:[#allocation2 + $0x78] sm:$0xff] 0.0
    $region25: #{tpu_custom_call.1} parent=1 // pred_fallthru
      _
    %v72 = vld [vmem:[#allocation2] sm:$0xff]
    %v73 = vld [vmem:[#allocation2 + $0x8] sm:$0xff]
    %v74 = vld [vmem:[#allocation2 + $0x10] sm:$0xff]
    %v75 = vld [vmem:[#allocation2 + $0x18] sm:$0xff]
    %v76 = vld [vmem:[#allocation2 + $0x20] sm:$0xff]
    %v77 = vld [vmem:[#allocation2 + $0x28] sm:$0xff]
    %v78 = vld [vmem:[#allocation2 + $0x30] sm:$0xff]
    %v79 = vld [vmem:[#allocation2 + $0x38] sm:$0xff]
    %v80 = vld [vmem:[#allocation2 + $0x40] sm:$0xff]
    %v81 = vld [vmem:[#allocation2 + $0x48] sm:$0xff]
    %v82 = vld [vmem:[#allocation2 + $0x50] sm:$0xff]
    %v83 = vld [vmem:[#allocation2 + $0x58] sm:$0xff]
    %v84 = vld [vmem:[#allocation2 + $0x60] sm:$0xff]
    %v85 = vld [vmem:[#allocation2 + $0x68] sm:$0xff]
    %v86 = vld [vmem:[#allocation2 + $0x70] sm:$0xff]
    %v87 = vld [vmem:[#allocation2 + $0x78] sm:$0xff]
    %v88 = vld [vmem:[#allocation3] sm:$0xf]
    %v89 = vld [vmem:[#allocation3 + $0x4] sm:$0xf]
    %v90 = vld [vmem:[#allocation3 + $0x8] sm:$0xf]
    %v91 = vld [vmem:[#allocation3 + $0xc] sm:$0xf]
    %v92 = vld [vmem:[#allocation3 + $0x10] sm:$0xf]
    %v93 = vld [vmem:[#allocation3 + $0x14] sm:$0xf]
    %v94 = vld [vmem:[#allocation3 + $0x18] sm:$0xf]
    %v95 = vld [vmem:[#allocation3 + $0x1c] sm:$0xf]
    %v96 = vld [vmem:[#allocation3 + $0x20] sm:$0xf]
    %v97 = vld [vmem:[#allocation3 + $0x24] sm:$0xf]
    %v98 = vld [vmem:[#allocation3 + $0x28] sm:$0xf]
    %v99 = vld [vmem:[#allocation3 + $0x2c] sm:$0xf]
    %v100 = vld [vmem:[#allocation3 + $0x30] sm:$0xf]
    %v101 = vld [vmem:[#allocation3 + $0x34] sm:$0xf]
    %v102 = vld [vmem:[#allocation3 + $0x38] sm:$0xf]
    %v103 = vld [vmem:[#allocation3 + $0x3c] sm:$0xf]
    %v104 = vld [vmem:[#allocation6] sm:$0xf]
    %v105 = vld [vmem:[#allocation6 + $0x4] sm:$0xf]
    %v106 = vld [vmem:[#allocation6 + $0x8] sm:$0xf]
    %v107 = vld [vmem:[#allocation6 + $0xc] sm:$0xf]
    %v108 = vld [vmem:[#allocation6 + $0x10] sm:$0xf]
    %v109 = vld [vmem:[#allocation6 + $0x14] sm:$0xf]
    %v110 = vld [vmem:[#allocation6 + $0x18] sm:$0xf]
    %v111 = vld [vmem:[#allocation6 + $0x1c] sm:$0xf]
    %v112 = vld [vmem:[#allocation6 + $0x20] sm:$0xf]
    %v113 = vld [vmem:[#allocation6 + $0x24] sm:$0xf]
    %v114 = vld [vmem:[#allocation6 + $0x28] sm:$0xf]
    %v115 = vld [vmem:[#allocation6 + $0x2c] sm:$0xf]
    %v116 = vld [vmem:[#allocation6 + $0x30] sm:$0xf]
    %v117 = vld [vmem:[#allocation6 + $0x34] sm:$0xf]
    %v118 = vld [vmem:[#allocation6 + $0x38] sm:$0xf]
    %v119 = vld [vmem:[#allocation6 + $0x3c] sm:$0xf]
    %v136 = vunpack.c.l.b16 %v88
    %v137 = vunpack.c.l.b16 %v89
    %v138 = vunpack.c.l.b16 %v90
    %v139 = vunpack.c.l.b16 %v91
    %v140 = vunpack.c.l.b16 %v92
    %v141 = vunpack.c.l.b16 %v93
    %v142 = vunpack.c.l.b16 %v94
    %v143 = vunpack.c.l.b16 %v95
    %v144 = vunpack.c.l.b16 %v96
    %v145 = vunpack.c.l.b16 %v97
    %v146 = vunpack.c.l.b16 %v98
    %v147 = vunpack.c.l.b16 %v99
    %v148 = vunpack.c.l.b16 %v100
    %v149 = vunpack.c.l.b16 %v101
    %v150 = vunpack.c.l.b16 %v102
    %v151 = vunpack.c.l.b16 %v103
    %v152 = vpack.c.b16 %v137, %v136
    %v153 = vpack.c.b16 %v139, %v138
    %v154 = vpack.c.b16 %v141, %v140
    %v155 = vpack.c.b16 %v143, %v142
    %v156 = vpack.c.b16 %v145, %v144
    %v157 = vpack.c.b16 %v147, %v146
    %v158 = vpack.c.b16 %v149, %v148
    %v159 = vpack.c.b16 %v151, %v150
    %v184 = vunpack.c.l.b16 %v104
    %v185 = vunpack.c.l.b16 %v105
    %v186 = vunpack.c.l.b16 %v106
    %v187 = vunpack.c.l.b16 %v107
    %v188 = vunpack.c.l.b16 %v108
    %v189 = vunpack.c.l.b16 %v109
    %v190 = vunpack.c.l.b16 %v110
    %v191 = vunpack.c.l.b16 %v111
    %v192 = vunpack.c.l.b16 %v112
    %v193 = vunpack.c.l.b16 %v113
    %v194 = vunpack.c.l.b16 %v114
    %v195 = vunpack.c.l.b16 %v115
    %v196 = vunpack.c.l.b16 %v116
    %v197 = vunpack.c.l.b16 %v117
    %v198 = vunpack.c.l.b16 %v118
    %v199 = vunpack.c.l.b16 %v119
    %v200 = vpack.c.b16 %v185, %v184
    %v201 = vpack.c.b16 %v187, %v186
    %v202 = vpack.c.b16 %v189, %v188
    %v203 = vpack.c.b16 %v191, %v190
    %v204 = vpack.c.b16 %v193, %v192
    %v205 = vpack.c.b16 %v195, %v194
    %v206 = vpack.c.b16 %v197, %v196
    %v207 = vpack.c.b16 %v199, %v198
    %216 = vmatprep.subr.bf16.mxu0 0
    %217 = vmatpush1.bf16.msra.mxu0 %v207
    %218 = vmatprep.subr.bf16.mxu0 0
    %219 = vmatpush1.bf16.msra.mxu0 %v206
    %220 = vmatprep.subr.bf16.mxu0 0
    %221 = vmatpush1.bf16.msra.mxu0 %v205
    %222 = vmatprep.subr.bf16.mxu0 0
    %223 = vmatpush1.bf16.msra.mxu0 %v204
    %224 = vmatprep.subr.bf16.mxu0 0
    %225 = vmatpush1.bf16.msra.mxu0 %v203
    %226 = vmatprep.subr.bf16.mxu0 0
    %227 = vmatpush1.bf16.msra.mxu0 %v202
    %228 = vmatprep.subr.bf16.mxu0 0
    %229 = vmatpush1.bf16.msra.mxu0 %v201
    %230 = vmatprep.subr.bf16.mxu0 0
    %231 = vmatpush1.bf16.msra.mxu0 %v200
    %232 = vmatprep.subr.bf16.mxu0 0
    %233 = vmatpush2.bf16.msra.mxu0 0
    %234 = vmatprep.subr.bf16.mxu0 0
    %235 = vmatpush2.bf16.msra.mxu0 0
    %236 = vmatprep.subr.bf16.mxu0 0
    %237 = vmatpush2.bf16.msra.mxu0 0
    %238 = vmatprep.subr.bf16.mxu0 0
    %239 = vmatpush2.bf16.msra.mxu0 0
    %240 = vmatprep.subr.bf16.mxu0 0
    %241 = vmatpush2.bf16.msra.mxu0 0
    %242 = vmatprep.subr.bf16.mxu0 0
    %243 = vmatpush2.bf16.msra.mxu0 0
    %244 = vmatprep.subr.bf16.mxu0 0
    %245 = vmatpush2.bf16.msra.mxu0 0
    %246 = vmatprep.subr.bf16.mxu0 0
    %247 = vmatpush2.bf16.msra.mxu0 0
    %248 = vmatprep.mubr.bf16.mxu0 0
    %249 = vmatmul.mubr.bf16.gmra.mxu0 %v152
    %v250 = vpop.f32.mrf.mxu0
    %v251 = vadd.f32 0.0, %v250
    %v252 = vpop.f32.mrf.mxu0
    %v253 = vpop.f32.mrf.mxu0
    %v254 = vadd.f32 0.0, %v253
    %v255 = vpop.f32.mrf.mxu0
    %256 = vmatprep.mubr.bf16.mxu0 0
    %257 = vmatmul.mubr.bf16.gmra.mxu0 %v153
    %v258 = vpop.f32.mrf.mxu0
    %v259 = vadd.f32 0.0, %v258
    %v260 = vpop.f32.mrf.mxu0
    %v261 = vpop.f32.mrf.mxu0
    %v262 = vadd.f32 0.0, %v261
    %v263 = vpop.f32.mrf.mxu0
    %264 = vmatprep.mubr.bf16.mxu0 0
    %265 = vmatmul.mubr.bf16.gmra.mxu0 %v154
    %v266 = vpop.f32.mrf.mxu0
    %v267 = vadd.f32 0.0, %v266
    %v268 = vpop.f32.mrf.mxu0
    %v269 = vpop.f32.mrf.mxu0
    %v270 = vadd.f32 0.0, %v269
    %v271 = vpop.f32.mrf.mxu0
    %272 = vmatprep.mubr.bf16.mxu0 0
    %273 = vmatmul.mubr.bf16.gmra.mxu0 %v155
    %v274 = vpop.f32.mrf.mxu0
    %v275 = vadd.f32 0.0, %v274
    %v276 = vpop.f32.mrf.mxu0
    %v277 = vpop.f32.mrf.mxu0
    %v278 = vadd.f32 0.0, %v277
    %v279 = vpop.f32.mrf.mxu0
    %280 = vmatprep.mubr.bf16.mxu0 0
    %281 = vmatmul.mubr.bf16.gmra.mxu0 %v156
    %v282 = vpop.f32.mrf.mxu0
    %v283 = vadd.f32 0.0, %v282
    %v284 = vpop.f32.mrf.mxu0
    %v285 = vpop.f32.mrf.mxu0
    %v286 = vadd.f32 0.0, %v285
    %v287 = vpop.f32.mrf.mxu0
    %288 = vmatprep.mubr.bf16.mxu0 0
    %289 = vmatmul.mubr.bf16.gmra.mxu0 %v157
    %v290 = vpop.f32.mrf.mxu0
    %v291 = vadd.f32 0.0, %v290
    %v292 = vpop.f32.mrf.mxu0
    %v293 = vpop.f32.mrf.mxu0
    %v294 = vadd.f32 0.0, %v293
    %v295 = vpop.f32.mrf.mxu0
    %296 = vmatprep.mubr.bf16.mxu0 0
    %297 = vmatmul.mubr.bf16.gmra.mxu0 %v158
    %v298 = vpop.f32.mrf.mxu0
    %v299 = vadd.f32 0.0, %v298
    %v300 = vpop.f32.mrf.mxu0
    %v301 = vpop.f32.mrf.mxu0
    %v302 = vadd.f32 0.0, %v301
    %v303 = vpop.f32.mrf.mxu0
    %304 = vmatprep.mubr.bf16.mxu0 0
    %305 = vmatmul.mubr.bf16.gmra.mxu0 %v159
    %v306 = vpop.f32.mrf.mxu0
    %v307 = vadd.f32 0.0, %v306
    %v308 = vpop.f32.mrf.mxu0
    %v309 = vpop.f32.mrf.mxu0
    %v310 = vadd.f32 0.0, %v309
    %v311 = vpop.f32.mrf.mxu0
    %312 = vdwg.mxu0
    %v313 = vadd.f32 %v72, %v251
    %v314 = vadd.f32 %v73, %v254
    %v315 = vadd.f32 %v74, %v259
    %v316 = vadd.f32 %v75, %v262
    %v317 = vadd.f32 %v76, %v267
    %v318 = vadd.f32 %v77, %v270
    %v319 = vadd.f32 %v78, %v275
    %v320 = vadd.f32 %v79, %v278
    %v321 = vadd.f32 %v80, %v283
    %v322 = vadd.f32 %v81, %v286
    %v323 = vadd.f32 %v82, %v291
    %v324 = vadd.f32 %v83, %v294
    %v325 = vadd.f32 %v84, %v299
    %v326 = vadd.f32 %v85, %v302
    %v327 = vadd.f32 %v86, %v307
    %v328 = vadd.f32 %v87, %v310
    %329 = vst [vmem:[#allocation2] sm:$0xff] %v313
    %330 = vst [vmem:[#allocation2 + $0x8] sm:$0xff] %v314
    %331 = vst [vmem:[#allocation2 + $0x10] sm:$0xff] %v315
    %332 = vst [vmem:[#allocation2 + $0x18] sm:$0xff] %v316
    %333 = vst [vmem:[#allocation2 + $0x20] sm:$0xff] %v317
    %334 = vst [vmem:[#allocation2 + $0x28] sm:$0xff] %v318
    %335 = vst [vmem:[#allocation2 + $0x30] sm:$0xff] %v319
    %336 = vst [vmem:[#allocation2 + $0x38] sm:$0xff] %v320
    %337 = vst [vmem:[#allocation2 + $0x40] sm:$0xff] %v321
    %338 = vst [vmem:[#allocation2 + $0x48] sm:$0xff] %v322
    %339 = vst [vmem:[#allocation2 + $0x50] sm:$0xff] %v323
    %340 = vst [vmem:[#allocation2 + $0x58] sm:$0xff] %v324
    %341 = vst [vmem:[#allocation2 + $0x60] sm:$0xff] %v325
    %342 = vst [vmem:[#allocation2 + $0x68] sm:$0xff] %v326
    %343 = vst [vmem:[#allocation2 + $0x70] sm:$0xff] %v327
    %344 = vst [vmem:[#allocation2 + $0x78] sm:$0xff] %v328
    // Predicated region
    $region26: #{tpu_custom_call.1} parent=1 // pred_check
      %p345 = pneg %p46
    $region27: #{tpu_custom_call.1} parent=1 // pred_check_branch
      %347 = sbr.rel (%p345) target = $region29
    $region28: #{tpu_custom_call.1} parent=1 // pred_region
      %v348 = vld [vmem:[#allocation2] sm:$0xff]
      %v349 = vld [vmem:[#allocation2 + $0x8] sm:$0xff]
      %v350 = vld [vmem:[#allocation2 + $0x10] sm:$0xff]
      %v351 = vld [vmem:[#allocation2 + $0x18] sm:$0xff]
      %v352 = vld [vmem:[#allocation2 + $0x20] sm:$0xff]
      %v353 = vld [vmem:[#allocation2 + $0x28] sm:$0xff]
      %v354 = vld [vmem:[#allocation2 + $0x30] sm:$0xff]
      %v355 = vld [vmem:[#allocation2 + $0x38] sm:$0xff]
      %v356 = vld [vmem:[#allocation2 + $0x40] sm:$0xff]
      %v357 = vld [vmem:[#allocation2 + $0x48] sm:$0xff]
      %v358 = vld [vmem:[#allocation2 + $0x50] sm:$0xff]
      %v359 = vld [vmem:[#allocation2 + $0x58] sm:$0xff]
      %v360 = vld [vmem:[#allocation2 + $0x60] sm:$0xff]
      %v361 = vld [vmem:[#allocation2 + $0x68] sm:$0xff]
      %v362 = vld [vmem:[#allocation2 + $0x70] sm:$0xff]
      %v363 = vld [vmem:[#allocation2 + $0x78] sm:$0xff]
      %v364 = vpack.c.bf16 %v349, %v348
      %v365 = vpack.c.bf16 %v351, %v350
      %v366 = vpack.c.bf16 %v353, %v352
      %v367 = vpack.c.bf16 %v355, %v354
      %v368 = vpack.c.bf16 %v357, %v356
      %v369 = vpack.c.bf16 %v359, %v358
      %v370 = vpack.c.bf16 %v361, %v360
      %v371 = vpack.c.bf16 %v363, %v362
      %v380 = vunpack.c.l.b16 %v364
      %v381 = vunpack.c.h.b16 %v364
      %v382 = vunpack.c.l.b16 %v365
      %v383 = vunpack.c.h.b16 %v365
      %v384 = vunpack.c.l.b16 %v366
      %v385 = vunpack.c.h.b16 %v366
      %v386 = vunpack.c.l.b16 %v367
      %v387 = vunpack.c.h.b16 %v367
      %v388 = vunpack.c.l.b16 %v368
      %v389 = vunpack.c.h.b16 %v368
      %v390 = vunpack.c.l.b16 %v369
      %v391 = vunpack.c.h.b16 %v369
      %v392 = vunpack.c.l.b16 %v370
      %v393 = vunpack.c.h.b16 %v370
      %v394 = vunpack.c.l.b16 %v371
      %v395 = vunpack.c.h.b16 %v371
      %v396 = vpack.c.b16 %v380, %v380
      %v397 = vpack.c.b16 %v381, %v381
      %v398 = vpack.c.b16 %v382, %v382
      %v399 = vpack.c.b16 %v383, %v383
      %v400 = vpack.c.b16 %v384, %v384
      %v401 = vpack.c.b16 %v385, %v385
      %v402 = vpack.c.b16 %v386, %v386
      %v403 = vpack.c.b16 %v387, %v387
      %v404 = vpack.c.b16 %v388, %v388
      %v405 = vpack.c.b16 %v389, %v389
      %v406 = vpack.c.b16 %v390, %v390
      %v407 = vpack.c.b16 %v391, %v391
      %v408 = vpack.c.b16 %v392, %v392
      %v409 = vpack.c.b16 %v393, %v393
      %v410 = vpack.c.b16 %v394, %v394
      %v411 = vpack.c.b16 %v395, %v395
      %428 = vst [vmem:[#allocation8] sm:$0xf] %v396
      %429 = vst [vmem:[#allocation8 + $0x4] sm:$0xf] %v397
      %430 = vst [vmem:[#allocation8 + $0x8] sm:$0xf] %v398
      %431 = vst [vmem:[#allocation8 + $0xc] sm:$0xf] %v399
      %432 = vst [vmem:[#allocation8 + $0x10] sm:$0xf] %v400
      %433 = vst [vmem:[#allocation8 + $0x14] sm:$0xf] %v401
      %434 = vst [vmem:[#allocation8 + $0x18] sm:$0xf] %v402
      %435 = vst [vmem:[#allocation8 + $0x1c] sm:$0xf] %v403
      %436 = vst [vmem:[#allocation8 + $0x20] sm:$0xf] %v404
      %437 = vst [vmem:[#allocation8 + $0x24] sm:$0xf] %v405
      %438 = vst [vmem:[#allocation8 + $0x28] sm:$0xf] %v406
      %439 = vst [vmem:[#allocation8 + $0x2c] sm:$0xf] %v407
      %440 = vst [vmem:[#allocation8 + $0x30] sm:$0xf] %v408
      %441 = vst [vmem:[#allocation8 + $0x34] sm:$0xf] %v409
      %442 = vst [vmem:[#allocation8 + $0x38] sm:$0xf] %v410
      %443 = vst [vmem:[#allocation8 + $0x3c] sm:$0xf] %v411
      %v444 = vld [vmem:[#allocation9] sm:$0x1]
      %v445 = vadd.f32 %v348, %v349
      %v446 = vadd.f32 %v445, %v350
      %v447 = vadd.f32 %v446, %v351
      %v448 = vadd.f32 %v447, %v352
      %v449 = vadd.f32 %v448, %v353
      %v450 = vadd.f32 %v449, %v354
      %v451 = vadd.f32 %v450, %v355
      %v452 = vadd.f32 %v451, %v356
      %v453 = vadd.f32 %v452, %v357
      %v454 = vadd.f32 %v453, %v358
      %v455 = vadd.f32 %v454, %v359
      %v456 = vadd.f32 %v455, %v360
      %v457 = vadd.f32 %v456, %v361
      %v458 = vadd.f32 %v457, %v362
      %v459 = vadd.f32 %v458, %v363
      %v460 = vrot.slane %v459, 4
      %v461 = vadd.f32 %v459, %v460
      %v462 = vrot.slane %v461, 2
      %v463 = vadd.f32 %v461, %v462
      %v464 = vrot.slane %v463, 1
      %v465 = vadd.f32 %v463, %v464
      %v466 = vadd.f32 %v444, %v465
      %467 = vst [vmem:[#allocation9] sm:$0x1] %v466
      %v468 = vld [vmem:[#allocation11] sm:$0x1]
      %v469 = vmul.f32 %v348, %v348
      %v470 = vmul.f32 %v349, %v349
      %v471 = vmul.f32 %v350, %v350
      %v472 = vmul.f32 %v351, %v351
      %v473 = vmul.f32 %v352, %v352
      %v474 = vmul.f32 %v353, %v353
      %v475 = vmul.f32 %v354, %v354
      %v476 = vmul.f32 %v355, %v355
      %v477 = vmul.f32 %v356, %v356
      %v478 = vmul.f32 %v357, %v357
      %v479 = vmul.f32 %v358, %v358
      %v480 = vmul.f32 %v359, %v359
      %v481 = vmul.f32 %v360, %v360
      %v482 = vmul.f32 %v361, %v361
      %v483 = vmul.f32 %v362, %v362
      %v484 = vmul.f32 %v363, %v363
      %v485 = vadd.f32 %v469, %v470
      %v486 = vadd.f32 %v485, %v471
      %v487 = vadd.f32 %v486, %v472
      %v488 = vadd.f32 %v487, %v473
      %v489 = vadd.f32 %v488, %v474
      %v490 = vadd.f32 %v489, %v475
      %v491 = vadd.f32 %v490, %v476
      %v492 = vadd.f32 %v491, %v477
      %v493 = vadd.f32 %v492, %v478
      %v494 = vadd.f32 %v493, %v479
      %v495 = vadd.f32 %v494, %v480
      %v496 = vadd.f32 %v495, %v481
      %v497 = vadd.f32 %v496, %v482
      %v498 = vadd.f32 %v497, %v483
      %v499 = vadd.f32 %v498, %v484
      %v500 = vrot.slane %v499, 4
      %v501 = vadd.f32 %v499, %v500
      %v502 = vrot.slane %v501, 2
      %v503 = vadd.f32 %v501, %v502
      %v504 = vrot.slane %v503, 1
      %v505 = vadd.f32 %v503, %v504
      %v506 = vadd.f32 %v468, %v505
      %507 = vst [vmem:[#allocation11] sm:$0x1] %v506
    $region29: #{tpu_custom_call.1} parent=1 // pred_fallthru
      _
    // Predicated region
    $region30: #{tpu_custom_call.1} parent=1 // pred_check
      _
    $region31: #{tpu_custom_call.1} parent=1 // pred_check_branch
      %509 = sbr.rel (0) target = $region33
    $region32: #{tpu_custom_call.1} parent=1 // pred_region
      %s511 = ssub.s32 1024, 1024
      %512 = vsyncadd [#allocation5], %s511
      %s513 = sshll.u32 [#allocation8], 4
      %s514 = int_to_ptr.vmem [resolvable:$true] %s513
      %519 = dma.vmem_to_hbm [thread:$0]  %s514, 1024, %s2, [#allocation5], 64, 64, 4
    $region33: #{tpu_custom_call.1} parent=1 // pred_fallthru
      _
    // Predicated region
    $region34: #{tpu_custom_call.1} parent=1 // pred_check
      _
    $region35: #{tpu_custom_call.1} parent=1 // pred_check_branch
      %521 = sbr.rel (0) target = $region37
    $region36: #{tpu_custom_call.1} parent=1 // pred_region
      %s523 = ssub.s32 16, 16
      %524 = vsyncadd [#allocation10], %s523
      %s526 = sshll.u32 [#allocation9], 4
      %s527 = int_to_ptr.vmem [resolvable:$true] %s526
      %529 = dma.vmem_to_hbm [thread:$0]  %s527, 16, %s3, [#allocation10]
    $region37: #{tpu_custom_call.1} parent=1 // pred_fallthru
      _
    // Predicated region
    $region38: #{tpu_custom_call.1} parent=1 // pred_check
      _
    $region39: #{tpu_custom_call.1} parent=1 // pred_check_branch
      %531 = sbr.rel (0) target = $region41
    $region40: #{tpu_custom_call.1} parent=1 // pred_region
      %s533 = ssub.s32 16, 16
      %534 = vsyncadd [#allocation10], %s533
      %s536 = sshll.u32 [#allocation11], 4
      %s537 = int_to_ptr.vmem [resolvable:$true] %s536
      %539 = dma.vmem_to_hbm [thread:$0]  %s537, 16, %s4, [#allocation10]
    $region41: #{tpu_custom_call.1} parent=1 // pred_fallthru
      _
    // Predicated region
    $region42: #{tpu_custom_call.1} parent=1 // pred_check
      _
    $region43: #{tpu_custom_call.1} parent=1 // pred_check_branch
      %541 = sbr.rel (0) target = $region45
    $region44: #{tpu_custom_call.1} parent=1 // pred_region
      %542 = dma.done [#allocation5], 1024
    $region45: #{tpu_custom_call.1} parent=1 // pred_fallthru
      _
    // Predicated region
    $region46: #{tpu_custom_call.1} parent=1 // pred_check
      _
    $region47: #{tpu_custom_call.1} parent=1 // pred_check_branch
      %544 = sbr.rel (0) target = $region49
    $region48: #{tpu_custom_call.1} parent=1 // pred_region
      %545 = dma.done [#allocation10], 16
    $region49: #{tpu_custom_call.1} parent=1 // pred_fallthru
      _
    // Predicated region
    $region50: #{tpu_custom_call.1} parent=1 // pred_check
      _
    $region51: #{tpu_custom_call.1} parent=1 // pred_check_branch
      %547 = sbr.rel (0) target = $region53
    $region52: #{tpu_custom_call.1} parent=1 // pred_region
      %548 = dma.done [#allocation10], 16
    $region53: #{tpu_custom_call.1} parent=1 // pred_fallthru
      _
    %549 = vsyncpa [#allocation4], 1
    %550 = vsyncpa [#allocation7], 1
    %551 = vsyncpa [#allocation5], 1
    %552 = vsyncpa [#allocation10], 1

</llo_original>
